<compile_context>
chip_gen: v7x
topology: tpu7x:2x2x1
jax: 0.10.0
libtpu: 0.0.40
codegen_flags: <defaults>
</compile_context>

<pallas_src>
import functools

import jax
import jax.numpy as jnp
from jax.experimental import pallas as pl
from jax.experimental.pallas import tpu as pltpu


def _round_up(x, m):
    return (x + m - 1) // m * m


# ----------------------------------------------------------------------------
# Pooler glue (ROIAlign, torchvision semantics, aligned=False), NHWC layout.
# TODO(synk): the per-ROI bilinear gather is data-dependent and stays in plain
#             JAX; a Pallas version would need PrefetchScalarGridSpec carrying
#             precomputed per-ROI integer taps + bilinear weights.
# ----------------------------------------------------------------------------
def _bilinear_interp_nhwc(fmap, y, x):
    """fmap: [H, W, C]; y, x: [...] sample coords -> [..., C] values."""
    H, W, C = fmap.shape
    valid = (y > -1.0) & (y < H) & (x > -1.0) & (x < W)
    y = jnp.clip(y, 0.0, None)
    x = jnp.clip(x, 0.0, None)
    y_low = jnp.minimum(jnp.floor(y).astype(jnp.int32), H - 1)
    x_low = jnp.minimum(jnp.floor(x).astype(jnp.int32), W - 1)
    y_high = jnp.minimum(y_low + 1, H - 1)
    x_high = jnp.minimum(x_low + 1, W - 1)
    ly = y - y_low.astype(y.dtype)
    lx = x - x_low.astype(x.dtype)
    hy = 1.0 - ly
    hx = 1.0 - lx
    v1 = fmap[y_low, x_low]      # [..., C]  (C is the fast, lane-contiguous axis)
    v2 = fmap[y_low, x_high]
    v3 = fmap[y_high, x_low]
    v4 = fmap[y_high, x_high]
    val = (hy * hx)[..., None] * v1 + (hy * lx)[..., None] * v2 \
        + (ly * hx)[..., None] * v3 + (ly * lx)[..., None] * v4
    return jnp.where(valid[..., None], val, 0.0)


def roi_align_nhwc(feat_nhwc, rois, output_size, spatial_scale, sampling_ratio):
    """feat_nhwc: [N, H, W, C]; rois: [R, 5] = (batch_idx, x1, y1, x2, y2) in
    image coordinates.  Returns [R, PH, PW, C] (ROIAlign, aligned=False)."""
    N, H, W, C = feat_nhwc.shape
    ph, pw = output_size
    s = sampling_ratio

    def one_roi(roi):
        b = roi[0].astype(jnp.int32)
        fmap = jax.lax.dynamic_index_in_dim(feat_nhwc, b, axis=0, keepdims=False)
        x1 = roi[1] * spatial_scale
        y1 = roi[2] * spatial_scale
        x2 = roi[3] * spatial_scale
        y2 = roi[4] * spatial_scale
        roi_w = jnp.maximum(x2 - x1, 1.0)
        roi_h = jnp.maximum(y2 - y1, 1.0)
        bin_h = roi_h / ph
        bin_w = roi_w / pw
        frac = (jnp.arange(s, dtype=jnp.float32) + 0.5) / s                     # [s]
        ys = y1 + (jnp.arange(ph, dtype=jnp.float32)[:, None] + frac[None]) * bin_h  # [ph, s]
        xs = x1 + (jnp.arange(pw, dtype=jnp.float32)[:, None] + frac[None]) * bin_w  # [pw, s]
        Y = jnp.broadcast_to(ys[:, None, :, None], (ph, pw, s, s))
        X = jnp.broadcast_to(xs[None, :, None, :], (ph, pw, s, s))
        vals = _bilinear_interp_nhwc(fmap, Y, X)                                # [ph, pw, s, s, C]
        return vals.mean(axis=(2, 3))                                           # [ph, pw, C]

    return jax.vmap(one_roi)(rois)


# ----------------------------------------------------------------------------
# Pallas kernel: fused fc6 -> ReLU -> fc7 -> ReLU
# grid = (R tiles [parallel], K tiles over fc6 input dim [arbitrary])
# ----------------------------------------------------------------------------
def _mlp2_kernel(x_ref, w6_ref, b6_ref, w7_ref, b7_ref, o_ref, acc_ref):
    k = pl.program_id(1)

    @pl.when(k == 0)
    def _init():
        acc_ref[...] = jnp.zeros_like(acc_ref)

    # fc6 partial product for this K slab (MXU, f32 accumulation).
    acc_ref[...] += jnp.dot(x_ref[...], w6_ref[...],
                            preferred_element_type=jnp.float32)

    @pl.when(k == pl.num_programs(1) - 1)
    def _epilogue():
        h = jnp.maximum(acc_ref[...] + b6_ref[...], 0.0)        # fc6 bias + ReLU (f32)
        y = jnp.dot(h.astype(w7_ref.dtype), w7_ref[...],
                    preferred_element_type=jnp.float32)         # fc7 (MXU)
        y = jnp.maximum(y + b7_ref[...], 0.0)                   # fc7 bias + ReLU
        o_ref[...] = y.astype(o_ref.dtype)


def mlp2_head(x_flat, w6, b6, w7, b7, *, compute_dtype=jnp.bfloat16,
              out_dtype=jnp.float32, tm_max=256, tk_max=2048):
    """x_flat: [R, D]; w6: [D, M]; b6: [1, M]; w7: [M, M]; b7: [1, M].
    Weights are stored as [in, out] (nn.Linear.weight.T)."""
    R, D = x_flat.shape
    M = w6.shape[1]

    # ---- tile sizing --------------------------------------------------------
    Mp = _round_up(max(M, 128), 128)     # lane-dense output / hidden width
    Rp = _round_up(R, 8)                 # sublane-aligned rows
    TM = min(Rp, tm_max)                 # ROI tile ("parallel" axis)
    if D <= tk_max:
        Dp, TK = D, D                    # single K step, full-extent block
    else:
        Dp = _round_up(D, 128)
        TK = 128
        for cand in range(tk_max, 127, -128):   # largest 128-multiple dividing Dp
            if Dp % cand == 0:
                TK = cand
                break

    # ---- zero-pad / cast (padded rows/cols contribute exactly 0) ------------
    x_p = jnp.pad(x_flat, ((0, Rp - R), (0, Dp - D))).astype(compute_dtype)
    w6_p = jnp.pad(w6, ((0, Dp - D), (0, Mp - M))).astype(compute_dtype)
    w7_p = jnp.pad(w7, ((0, Mp - M), (0, Mp - M))).astype(compute_dtype)
    b6_p = jnp.pad(b6, ((0, 0), (0, Mp - M))).astype(jnp.float32)
    b7_p = jnp.pad(b7, ((0, 0), (0, Mp - M))).astype(jnp.float32)

    # ---- explicit VMEM budget (valid on v5e/v6e/v7x: cap at 48 MiB) ---------
    cb = jnp.dtype(compute_dtype).itemsize
    ob = jnp.dtype(out_dtype).itemsize
    need = (2 * TM * TK * cb          # x stream, double-buffered
            + 2 * TK * Mp * cb        # w6 stream, double-buffered
            + Mp * Mp * cb            # w7, single-buffered (Buffered(1))
            + 2 * Mp * 4              # biases, single-buffered
            + 2 * TM * Mp * ob        # output, double-buffered
            + TM * Mp * 4)            # f32 accumulator scratch
    vmem_limit = int(min(48 * 1024 * 1024, max(2 * need, 32 * 1024 * 1024)))

    grid = (pl.cdiv(Rp, TM), Dp // TK)

    out = pl.pallas_call(
        _mlp2_kernel,
        out_shape=jax.ShapeDtypeStruct((Rp, Mp), out_dtype),
        grid=grid,
        in_specs=[
            pl.BlockSpec((TM, TK), lambda i, k: (i, k)),
            pl.BlockSpec((TK, Mp), lambda i, k: (k, 0)),
            pl.BlockSpec((1, Mp), lambda i, k: (0, 0),
                         pipeline_mode=pl.Buffered(1)),
            pl.BlockSpec((Mp, Mp), lambda i, k: (0, 0),
                         pipeline_mode=pl.Buffered(1)),
            pl.BlockSpec((1, Mp), lambda i, k: (0, 0),
                         pipeline_mode=pl.Buffered(1)),
        ],
        out_specs=pl.BlockSpec((TM, Mp), lambda i, k: (i, 0)),
        scratch_shapes=[pltpu.VMEM((TM, Mp), jnp.float32)],
        compiler_params=pltpu.CompilerParams(
            dimension_semantics=("parallel", "arbitrary"),
            vmem_limit_bytes=vmem_limit),
    )(x_p, w6_p, b6_p, w7_p, b7_p)

    return out[:R, :M]


# ----------------------------------------------------------------------------
# roi_2mlp_head forward
# ----------------------------------------------------------------------------
def roi_2mlp_head_forward(feat, rois, params, *, resolution, spatial_scale,
                          sampling_ratio):
    N, C, H, W = feat.shape
    ph, pw = resolution
    # NHWC so each bilinear tap in the pooler is a lane-contiguous C-wide load.
    feat_nhwc = jnp.transpose(feat, (0, 2, 3, 1))
    pooled = roi_align_nhwc(feat_nhwc, rois, resolution, spatial_scale,
                            sampling_ratio)                      # [R, ph, pw, C]
    R = pooled.shape[0]
    x_flat = pooled.reshape(R, ph * pw * C)
    # fc6 weight rows are in PyTorch (C, ph, pw) flatten order; permute once to
    # the (ph, pw, C) order produced above -> identical math to the reference.
    w6 = params["w6"]
    M = w6.shape[1]
    w6_hwcm = w6.reshape(C, ph, pw, M).transpose(1, 2, 0, 3).reshape(C * ph * pw, M)
    return mlp2_head(x_flat, w6_hwcm, params["b6"], params["w7"], params["b7"])


if __name__ == "__main__":
    key = jax.random.PRNGKey(0)
    k_feat, k_box, k_w6, k_b6, k_w7, k_b7 = jax.random.split(key, 6)

    # Config (small, consistent with the module):
    N, C, H, W = 2, 4, 16, 16          # feature maps (NCHW), dim_in = 4
    resolution = (4, 4)                # ROI_XFORM_RESOLUTION
    spatial_scale = 0.25               # feature stride 4 -> image is 64x64
    sampling_ratio = 2                 # ROI_XFORM_SAMPLING_RATIO
    mlp_dim = 32                       # MLP_HEAD.MLP_DIM
    R = 8                              # total number of proposals
    input_size = C * resolution[0] * resolution[1]   # 64

    feat = jax.random.normal(k_feat, (N, C, H, W), dtype=jnp.float32)

    # Proposals: [R, 5] = (batch_idx, x1, y1, x2, y2) in image coords (64x64)
    img_size = H / spatial_scale
    cxy = jax.random.uniform(k_box, (R, 2), minval=8.0, maxval=img_size - 8.0)
    wh = jax.random.uniform(jax.random.fold_in(k_box, 1), (R, 2),
                            minval=6.0, maxval=14.0)
    x1y1 = jnp.clip(cxy - wh / 2.0, 0.0, img_size - 1.0)
    x2y2 = jnp.clip(cxy + wh / 2.0, 1.0, img_size)
    batch_idx = (jnp.arange(R) % N).astype(jnp.float32)[:, None]
    rois = jnp.concatenate([batch_idx, x1y1[:, :1], x1y1[:, 1:],
                            x2y2[:, :1], x2y2[:, 1:]], axis=1)

    # Deterministic parameters (weights stored as [in, out] = nn.Linear.weight.T,
    # fc6 rows in the PyTorch (C, PH, PW) flatten order).
    params = {
        "w6": 0.05 * jax.random.normal(k_w6, (input_size, mlp_dim), jnp.float32),
        "b6": 0.01 * jax.random.normal(k_b6, (1, mlp_dim), jnp.float32),
        "w7": 0.05 * jax.random.normal(k_w7, (mlp_dim, mlp_dim), jnp.float32),
        "b7": 0.01 * jax.random.normal(k_b7, (1, mlp_dim), jnp.float32),
    }

    fwd = jax.jit(functools.partial(
        roi_2mlp_head_forward,
        resolution=resolution,
        spatial_scale=spatial_scale,
        sampling_ratio=sampling_ratio))

    out = fwd(feat, rois, params)
    jax.block_until_ready(out)
    assert out.shape == (R, mlp_dim), out.shape

    # Pure-JAX f32 reference with PyTorch NCHW-flatten semantics.
    pooled_ref = roi_align_nhwc(jnp.transpose(feat, (0, 2, 3, 1)), rois,
                                resolution, spatial_scale, sampling_ratio)
    x_ref = jnp.transpose(pooled_ref, (0, 3, 1, 2)).reshape(R, -1)
    h_ref = jnp.maximum(x_ref @ params["w6"] + params["b6"], 0.0)
    y_ref = jnp.maximum(h_ref @ params["w7"] + params["b7"], 0.0)
    assert jnp.allclose(out, y_ref, atol=5e-2, rtol=5e-2), \
        float(jnp.max(jnp.abs(out - y_ref)))

    print("KERNEL_OK")
</pallas_src>

<mosaic_0001>
module attributes {stable_mosaic.version = 11 : i64} {
  func.func @_mlp2_kernel(%arg0: i32, %arg1: i32, %arg2: memref<8x64xbf16, #tpu.memory_space<vmem>>, %arg3: memref<64x128xbf16, #tpu.memory_space<vmem>>, %arg4: memref<1x128xf32, #tpu.memory_space<vmem>>, %arg5: memref<128x128xbf16, #tpu.memory_space<vmem>>, %arg6: memref<1x128xf32, #tpu.memory_space<vmem>>, %arg7: memref<8x128xf32, #tpu.memory_space<vmem>>, %arg8: memref<8x128xf32, #tpu.memory_space<vmem>>) attributes {dimension_semantics = [#tpu.dimension_semantics<parallel>, #tpu.dimension_semantics<arbitrary>], iteration_bounds = array<i64: 1, 1>, scalar_prefetch = 0 : i64, scratch_operands = 1 : i64, tpu.core_type = #tpu.core_type<tc>, window_params = [{transform_indices = @transform_0, window_bounds = array<i64: 8, 64>}, {transform_indices = @transform_1, window_bounds = array<i64: 64, 128>}, {pipeline_mode = #tpu.pipeline_mode<synchronous>, transform_indices = @transform_2, window_bounds = array<i64: 1, 128>}, {pipeline_mode = #tpu.pipeline_mode<synchronous>, transform_indices = @transform_3, window_bounds = array<i64: 128, 128>}, {pipeline_mode = #tpu.pipeline_mode<synchronous>, transform_indices = @transform_4, window_bounds = array<i64: 1, 128>}, {transform_indices = @transform_5, window_bounds = array<i64: 8, 128>}]} {
    %c0_i32 = arith.constant 0 : i32
    %0 = arith.cmpi eq, %arg1, %c0_i32 : i32
    %1 = arith.extui %0 : i1 to i32
    %c0_i32_0 = arith.constant 0 : i32
    %2 = arith.cmpi ne, %1, %c0_i32_0 : i32
    scf.if %2 {
      %cst_10 = arith.constant 0.000000e+00 : f32
      %12 = vector.broadcast %cst_10 : f32 to vector<8x128xf32>
      %c0_11 = arith.constant 0 : index
      %c0_12 = arith.constant 0 : index
      %13 = vector.load %arg8[%c0_11, %c0_12] : memref<8x128xf32, #tpu.memory_space<vmem>>, vector<8x128xf32>
      tpu.vector_store %arg8[%c0_11, %c0_12], %12 {strides = array<i32>} : memref<8x128xf32, #tpu.memory_space<vmem>>, vector<8x128xf32>,
    } else {
    }
    %c0 = arith.constant 0 : index
    %c0_1 = arith.constant 0 : index
    %3 = vector.load %arg8[%c0, %c0_1] : memref<8x128xf32, #tpu.memory_space<vmem>>, vector<8x128xf32>
    %c0_2 = arith.constant 0 : index
    %c0_3 = arith.constant 0 : index
    %4 = vector.load %arg2[%c0_2, %c0_3] : memref<8x64xbf16, #tpu.memory_space<vmem>>, vector<8x64xbf16>
    %c0_4 = arith.constant 0 : index
    %c0_5 = arith.constant 0 : index
    %5 = vector.load %arg3[%c0_4, %c0_5] : memref<64x128xbf16, #tpu.memory_space<vmem>>, vector<64x128xbf16>
    %cst = arith.constant dense<0.000000e+00> : vector<8x128xf32>
    %6 = tpu.matmul %4, %5, %cst {dimension_numbers = #tpu.dot_dimension_numbers<[1], [0], [0], [1], [0, 0, 1, 1], [], []>} : vector<8x64xbf16>, vector<64x128xbf16>, vector<8x128xf32> -> vector<8x128xf32>
    %7 = arith.addf %3, %6 : vector<8x128xf32>
    %c0_6 = arith.constant 0 : index
    %c0_7 = arith.constant 0 : index
    %8 = vector.load %arg8[%c0_6, %c0_7] : memref<8x128xf32, #tpu.memory_space<vmem>>, vector<8x128xf32>
    tpu.vector_store %arg8[%c0_6, %c0_7], %7 {strides = array<i32>} : memref<8x128xf32, #tpu.memory_space<vmem>>, vector<8x128xf32>,
    %c0_i32_8 = arith.constant 0 : i32
    %9 = arith.cmpi eq, %arg1, %c0_i32_8 : i32
    %10 = arith.extui %9 : i1 to i32
    %c0_i32_9 = arith.constant 0 : i32
    %11 = arith.cmpi ne, %10, %c0_i32_9 : i32
    scf.if %11 {
      %c0_10 = arith.constant 0 : index
      %c0_11 = arith.constant 0 : index
      %12 = vector.load %arg8[%c0_10, %c0_11] : memref<8x128xf32, #tpu.memory_space<vmem>>, vector<8x128xf32>
      %c0_12 = arith.constant 0 : index
      %c0_13 = arith.constant 0 : index
      %13 = vector.load %arg4[%c0_12, %c0_13] : memref<1x128xf32, #tpu.memory_space<vmem>>, vector<1x128xf32>
      %14 = vector.broadcast %13 : vector<1x128xf32> to vector<8x128xf32>
      %15 = arith.addf %12, %14 : vector<8x128xf32>
      %cst_14 = arith.constant 0.000000e+00 : f32
      %16 = vector.broadcast %cst_14 : f32 to vector<8x128xf32>
      %17 = arith.maximumf %15, %16 : vector<8x128xf32>
      %18 = arith.truncf %17 : vector<8x128xf32> to vector<8x128xbf16>
      %c0_15 = arith.constant 0 : index
      %c0_16 = arith.constant 0 : index
      %19 = vector.load %arg5[%c0_15, %c0_16] : memref<128x128xbf16, #tpu.memory_space<vmem>>, vector<128x128xbf16>
      %cst_17 = arith.constant dense<0.000000e+00> : vector<8x128xf32>
      %20 = tpu.matmul %18, %19, %cst_17 {dimension_numbers = #tpu.dot_dimension_numbers<[1], [0], [0], [1], [0, 0, 1, 1], [], []>} : vector<8x128xbf16>, vector<128x128xbf16>, vector<8x128xf32> -> vector<8x128xf32>
      %c0_18 = arith.constant 0 : index
      %c0_19 = arith.constant 0 : index
      %21 = vector.load %arg6[%c0_18, %c0_19] : memref<1x128xf32, #tpu.memory_space<vmem>>, vector<1x128xf32>
      %22 = vector.broadcast %21 : vector<1x128xf32> to vector<8x128xf32>
      %23 = arith.addf %20, %22 : vector<8x128xf32>
      %cst_20 = arith.constant 0.000000e+00 : f32
      %24 = vector.broadcast %cst_20 : f32 to vector<8x128xf32>
      %25 = arith.maximumf %23, %24 : vector<8x128xf32>
      %c0_21 = arith.constant 0 : index
      %c0_22 = arith.constant 0 : index
      %26 = vector.load %arg7[%c0_21, %c0_22] : memref<8x128xf32, #tpu.memory_space<vmem>>, vector<8x128xf32>
      tpu.vector_store %arg7[%c0_21, %c0_22], %25 {strides = array<i32>} : memref<8x128xf32, #tpu.memory_space<vmem>>, vector<8x128xf32>,
    } else {
    }
    return
  }
  func.func @transform_0(%arg0: i32, %arg1: i32) -> (i32, i32) {
    %c0_i32 = arith.constant 0 : i32
    return %arg0, %arg1 : i32, i32
  }
  func.func @transform_1(%arg0: i32, %arg1: i32) -> (i32, i32) {
    %c0_i32 = arith.constant 0 : i32
    %c0_i32_0 = arith.constant 0 : i32
    return %arg1, %c0_i32 : i32, i32
  }
  func.func @transform_2(%arg0: i32, %arg1: i32) -> (i32, i32) {
    %c0_i32 = arith.constant 0 : i32
    %c0_i32_0 = arith.constant 0 : i32
    %c0_i32_1 = arith.constant 0 : i32
    return %c0_i32, %c0_i32_0 : i32, i32
  }
  func.func @transform_3(%arg0: i32, %arg1: i32) -> (i32, i32) {
    %c0_i32 = arith.constant 0 : i32
    %c0_i32_0 = arith.constant 0 : i32
    %c0_i32_1 = arith.constant 0 : i32
    return %c0_i32, %c0_i32_0 : i32, i32
  }
  func.func @transform_4(%arg0: i32, %arg1: i32) -> (i32, i32) {
    %c0_i32 = arith.constant 0 : i32
    %c0_i32_0 = arith.constant 0 : i32
    %c0_i32_1 = arith.constant 0 : i32
    return %c0_i32, %c0_i32_0 : i32, i32
  }
  func.func @transform_5(%arg0: i32, %arg1: i32) -> (i32, i32) {
    %c0_i32 = arith.constant 0 : i32
    %c0_i32_0 = arith.constant 0 : i32
    return %arg0, %c0_i32 : i32, i32
  }
}

</mosaic_0001>

<llo_original>
// kernel: roi_2mlp_head_forward.1
$region0: #{roi_2mlp_head_forward.1}
  #allocation0 [shape = 'u32[]', space=smem, size = 0x4, offset = 0x4, fixed_abs, tag = 'smem constant byte address 0x4 - core index']
  #allocation1 [shape = 'u32[144,128]{1,0:T(1,128)}', space=vmem, size = 0x12000, scoped, tag = 'internal scratch']
  #allocation2 [shape = 'f32[8,128]{1,0:T(8,128)}', space=vmem, size = 0x1000, scoped, tag = 'scratch operand']
  %s0 = inlined_call_operand.vmem [shape: bf16[8,64], index: 0, kind: input, shape index: {}]
  %s1 = inlined_call_operand.vmem [shape: bf16[64,128], index: 1, kind: input, shape index: {}]
  %s2 = inlined_call_operand.vmem [shape: f32[1,128], index: 2, kind: input, shape index: {}]
  %s3 = inlined_call_operand.vmem [shape: bf16[128,128], index: 3, kind: input, shape index: {}]
  %s4 = inlined_call_operand.vmem [shape: f32[1,128], index: 4, kind: input, shape index: {}]
  %s5 = inlined_call_operand.hbm [shape: f32[8,128], index: 5, kind: output, shape index: {}]
  %s6 = sld [smem:[#allocation0]]
  $region38: #{roi_2mlp_head_forward.1} parent=0
    _
  %s8 = ssub.s32 1, %s6
  %s9 = scalar_select 0, %s8, %s6
  $region1: #{roi_2mlp_head_forward.1} parent=0
    #allocation3 [shape = 'u8[4096]{0}', space=vmem, size = 0x1000, scoped, tag = 'output window, operand 0, single buffered']
    #allocation4 [shape = 's32[1]{0}', space=sflag, size = 0x4, scoped, tag = 'scoped memory for roi_2mlp_head_forward.1']
    %10 = vsyncpa [#allocation4], 0
    // Predicated region
    $region2: #{roi_2mlp_head_forward.1} parent=1 // pred_check
      _
    $region3: #{roi_2mlp_head_forward.1} parent=1 // pred_check_branch
      %12 = sbr.rel (0) target = $region5
    $region4: #{roi_2mlp_head_forward.1} parent=1 // pred_region
      _
    $region5: #{roi_2mlp_head_forward.1} parent=1 // pred_fallthru
      _
    // Predicated region
    $region6: #{roi_2mlp_head_forward.1} parent=1 // pred_check
      _
    $region7: #{roi_2mlp_head_forward.1} parent=1 // pred_check_branch
      %14 = sbr.rel (0) target = $region9
    $region8: #{roi_2mlp_head_forward.1} parent=1 // pred_region
      _
    $region9: #{roi_2mlp_head_forward.1} parent=1 // pred_fallthru
      _
    // Predicated region
    $region10: #{roi_2mlp_head_forward.1} parent=1 // pred_check
      _
    $region11: #{roi_2mlp_head_forward.1} parent=1 // pred_check_branch
      %16 = sbr.rel (0) target = $region13
    $region12: #{roi_2mlp_head_forward.1} parent=1 // pred_region
      _
    $region13: #{roi_2mlp_head_forward.1} parent=1 // pred_fallthru
      _
    // Predicated region
    $region14: #{roi_2mlp_head_forward.1} parent=1 // pred_check
      _
    $region15: #{roi_2mlp_head_forward.1} parent=1 // pred_check_branch
      %18 = sbr.rel (0) target = $region17
    $region16: #{roi_2mlp_head_forward.1} parent=1 // pred_region
      _
    $region17: #{roi_2mlp_head_forward.1} parent=1 // pred_fallthru
      _
    // Predicated region
    $region18: #{roi_2mlp_head_forward.1} parent=1 // pred_check
      _
    $region19: #{roi_2mlp_head_forward.1} parent=1 // pred_check_branch
      %20 = sbr.rel (0) target = $region21
    $region20: #{roi_2mlp_head_forward.1} parent=1 // pred_region
      _
    $region21: #{roi_2mlp_head_forward.1} parent=1 // pred_fallthru
      _
    %p22 = scmp.eq.s32.totalorder 0, 0
    // Predicated region
    $region22: #{roi_2mlp_head_forward.1} parent=1 // pred_check
      %p23 = pneg %p22
    $region23: #{roi_2mlp_head_forward.1} parent=1 // pred_check_branch
      %25 = sbr.rel (%p23) target = $region25
    $region24: #{roi_2mlp_head_forward.1} parent=1 // pred_region
      %26 = vst [vmem:[#allocation2] sm:$0xff] 0.0
    $region25: #{roi_2mlp_head_forward.1} parent=1 // pred_fallthru
      _
    %v27 = vld [vmem:[#allocation2] sm:$0xff]
    %v28 = vld [vmem:[%s0] sm:$0xf]
    %v29 = vld [vmem:[%s1] sm:$0xf]
    %v30 = vld [vmem:[%s1 + $0x4] sm:$0xf]
    %v31 = vld [vmem:[%s1 + $0x8] sm:$0xf]
    %v32 = vld [vmem:[%s1 + $0xc] sm:$0xf]
    %v33 = vld [vmem:[%s1 + $0x10] sm:$0xf]
    %v34 = vld [vmem:[%s1 + $0x14] sm:$0xf]
    %v35 = vld [vmem:[%s1 + $0x18] sm:$0xf]
    %v36 = vld [vmem:[%s1 + $0x1c] sm:$0xf]
    %v45 = vunpack.c.l.b16 %v29
    %v46 = vunpack.c.l.b16 %v30
    %v47 = vunpack.c.l.b16 %v31
    %v48 = vunpack.c.l.b16 %v32
    %v49 = vunpack.c.l.b16 %v33
    %v50 = vunpack.c.l.b16 %v34
    %v51 = vunpack.c.l.b16 %v35
    %v52 = vunpack.c.l.b16 %v36
    %v53 = vpack.c.b16 %v46, %v45
    %v54 = vpack.c.b16 %v48, %v47
    %v55 = vpack.c.b16 %v50, %v49
    %v56 = vpack.c.b16 %v52, %v51
    %vm61 = vcmask 523264
    %v63 = vsel %vm61, %v28, 0
    %65 = vmatprep.subr.bf16.mxu0 0
    %66 = vmatpush1.bf16.msra.mxu0 %v53
    %67 = vmatprep.subr.bf16.mxu0 0
    %68 = vmatpush1.bf16.msra.mxu0 %v54
    %69 = vmatprep.subr.bf16.mxu0 0
    %70 = vmatpush1.bf16.msra.mxu0 %v55
    %71 = vmatprep.subr.bf16.mxu0 0
    %72 = vmatpush1.bf16.msra.mxu0 %v56
    %73 = vmatprep.subr.bf16.mxu0 0
    %74 = vmatpush1.bf16.msra.mxu0 0
    %75 = vmatprep.subr.bf16.mxu0 0
    %76 = vmatpush1.bf16.msra.mxu0 0
    %77 = vmatprep.subr.bf16.mxu0 0
    %78 = vmatpush1.bf16.msra.mxu0 0
    %79 = vmatprep.subr.bf16.mxu0 0
    %80 = vmatpush1.bf16.msra.mxu0 0
    %81 = vmatprep.subr.bf16.mxu0 0
    %82 = vmatpush1.bf16.msra.mxu0 0
    %83 = vmatprep.subr.bf16.mxu0 0
    %84 = vmatpush1.bf16.msra.mxu0 0
    %85 = vmatprep.subr.bf16.mxu0 0
    %86 = vmatpush1.bf16.msra.mxu0 0
    %87 = vmatprep.subr.bf16.mxu0 0
    %88 = vmatpush1.bf16.msra.mxu0 0
    %89 = vmatprep.subr.bf16.mxu0 0
    %90 = vmatpush1.bf16.msra.mxu0 0
    %91 = vmatprep.subr.bf16.mxu0 0
    %92 = vmatpush1.bf16.msra.mxu0 0
    %93 = vmatprep.subr.bf16.mxu0 0
    %94 = vmatpush1.bf16.msra.mxu0 0
    %95 = vmatprep.subr.bf16.mxu0 0
    %96 = vmatpush1.bf16.msra.mxu0 0
    %97 = vmatprep.mubr.bf16.mxu0 0
    %98 = vmatmul.mubr.bf16.gmra.mrb[0].mxu0 %v63
    %v99 = vpop.f32.mrb[0].mxu0
    %v100 = vadd.f32 0.0, %v99
    %v101 = vpop.f32.mrb[0].mxu0
    %v102 = vpop.f32.mrb[0].mxu0
    %v103 = vpop.f32.mrb[0].mxu0
    %104 = vdwg.mxu0
    %v105 = vadd.f32 %v27, %v100
    %106 = vst [vmem:[#allocation2] sm:$0xff] %v105
    // Predicated region
    $region26: #{roi_2mlp_head_forward.1} parent=1 // pred_check
      %p107 = pneg %p22
    $region27: #{roi_2mlp_head_forward.1} parent=1 // pred_check_branch
      %109 = sbr.rel (%p107) target = $region29
    $region28: #{roi_2mlp_head_forward.1} parent=1 // pred_region
      %v110 = vld [vmem:[#allocation2] sm:$0xff]
      %v111 = vld [vmem:[%s2] sm:$0x1]
      %v113 = vlaneseq
      %v114 = vshrl.u32 %v113, 7
      %v115 = vsub.s32 0, %v114
      %v116 = vrot.slane %v111, %v115
      %v118 = vadd.f32 %v110, %v116
      %v119 = vmax.f32 %v118, 0.0
      %v120 = vpack.c.bf16 %v119, %v119
      %v121 = vld [vmem:[%s3] sm:$0xf]
      %v122 = vld [vmem:[%s3 + $0x4] sm:$0xf]
      %v123 = vld [vmem:[%s3 + $0x8] sm:$0xf]
      %v124 = vld [vmem:[%s3 + $0xc] sm:$0xf]
      %v125 = vld [vmem:[%s3 + $0x10] sm:$0xf]
      %v126 = vld [vmem:[%s3 + $0x14] sm:$0xf]
      %v127 = vld [vmem:[%s3 + $0x18] sm:$0xf]
      %v128 = vld [vmem:[%s3 + $0x1c] sm:$0xf]
      %v129 = vld [vmem:[%s3 + $0x20] sm:$0xf]
      %v130 = vld [vmem:[%s3 + $0x24] sm:$0xf]
      %v131 = vld [vmem:[%s3 + $0x28] sm:$0xf]
      %v132 = vld [vmem:[%s3 + $0x2c] sm:$0xf]
      %v133 = vld [vmem:[%s3 + $0x30] sm:$0xf]
      %v134 = vld [vmem:[%s3 + $0x34] sm:$0xf]
      %v135 = vld [vmem:[%s3 + $0x38] sm:$0xf]
      %v136 = vld [vmem:[%s3 + $0x3c] sm:$0xf]
      %v137 = vld [vmem:[%s4] sm:$0x1]
      %v139 = vlaneseq
      %v140 = vshrl.u32 %v139, 7
      %v141 = vsub.s32 0, %v140
      %v142 = vrot.slane %v137, %v141
      %v160 = vunpack.c.l.b16 %v121
      %v161 = vunpack.c.l.b16 %v122
      %v162 = vunpack.c.l.b16 %v123
      %v163 = vunpack.c.l.b16 %v124
      %v164 = vunpack.c.l.b16 %v125
      %v165 = vunpack.c.l.b16 %v126
      %v166 = vunpack.c.l.b16 %v127
      %v167 = vunpack.c.l.b16 %v128
      %v168 = vunpack.c.l.b16 %v129
      %v169 = vunpack.c.l.b16 %v130
      %v170 = vunpack.c.l.b16 %v131
      %v171 = vunpack.c.l.b16 %v132
      %v172 = vunpack.c.l.b16 %v133
      %v173 = vunpack.c.l.b16 %v134
      %v174 = vunpack.c.l.b16 %v135
      %v175 = vunpack.c.l.b16 %v136
      %v176 = vpack.c.b16 %v161, %v160
      %v177 = vpack.c.b16 %v163, %v162
      %v178 = vpack.c.b16 %v165, %v164
      %v179 = vpack.c.b16 %v167, %v166
      %v180 = vpack.c.b16 %v169, %v168
      %v181 = vpack.c.b16 %v171, %v170
      %v182 = vpack.c.b16 %v173, %v172
      %v183 = vpack.c.b16 %v175, %v174
      %192 = vmatprep.subr.bf16.mxu0 0
      %193 = vmatpush1.bf16.msra.mxu0 %v176
      %194 = vmatprep.subr.bf16.mxu0 0
      %195 = vmatpush1.bf16.msra.mxu0 %v177
      %196 = vmatprep.subr.bf16.mxu0 0
      %197 = vmatpush1.bf16.msra.mxu0 %v178
      %198 = vmatprep.subr.bf16.mxu0 0
      %199 = vmatpush1.bf16.msra.mxu0 %v179
      %200 = vmatprep.subr.bf16.mxu0 0
      %201 = vmatpush1.bf16.msra.mxu0 %v180
      %202 = vmatprep.subr.bf16.mxu0 0
      %203 = vmatpush1.bf16.msra.mxu0 %v181
      %204 = vmatprep.subr.bf16.mxu0 0
      %205 = vmatpush1.bf16.msra.mxu0 %v182
      %206 = vmatprep.subr.bf16.mxu0 0
      %207 = vmatpush1.bf16.msra.mxu0 %v183
      %208 = vmatprep.subr.bf16.mxu0 0
      %209 = vmatpush1.bf16.msra.mxu0 0
      %210 = vmatprep.subr.bf16.mxu0 0
      %211 = vmatpush1.bf16.msra.mxu0 0
      %212 = vmatprep.subr.bf16.mxu0 0
      %213 = vmatpush1.bf16.msra.mxu0 0
      %214 = vmatprep.subr.bf16.mxu0 0
      %215 = vmatpush1.bf16.msra.mxu0 0
      %216 = vmatprep.subr.bf16.mxu0 0
      %217 = vmatpush1.bf16.msra.mxu0 0
      %218 = vmatprep.subr.bf16.mxu0 0
      %219 = vmatpush1.bf16.msra.mxu0 0
      %220 = vmatprep.subr.bf16.mxu0 0
      %221 = vmatpush1.bf16.msra.mxu0 0
      %222 = vmatprep.subr.bf16.mxu0 0
      %223 = vmatpush1.bf16.msra.mxu0 0
      %224 = vmatprep.mubr.bf16.mxu0 0
      %225 = vmatmul.mubr.bf16.gmra.mrb[0].mxu0 %v120
      %v226 = vpop.f32.mrb[0].mxu0
      %v227 = vadd.f32 %v142, %v226
      %v228 = vpop.f32.mrb[0].mxu0
      %v229 = vpop.f32.mrb[0].mxu0
      %v230 = vpop.f32.mrb[0].mxu0
      %231 = vdwg.mxu0
      %v232 = vmax.f32 %v227, 0.0
      %233 = vst [vmem:[#allocation3] sm:$0xff] %v232
    $region29: #{roi_2mlp_head_forward.1} parent=1 // pred_fallthru
      _
    // Predicated region
    $region30: #{roi_2mlp_head_forward.1} parent=1 // pred_check
      _
    $region31: #{roi_2mlp_head_forward.1} parent=1 // pred_check_branch
      %235 = sbr.rel (0) target = $region33
    $region32: #{roi_2mlp_head_forward.1} parent=1 // pred_region
      %s237 = ssub.s32 128, 128
      %238 = vsyncadd [#allocation4], %s237
      %s240 = sshll.u32 [#allocation3], 4
      %s241 = int_to_ptr.vmem [resolvable:$true] %s240
      %243 = dma.vmem_to_hbm [thread:$0]  %s241, 128, %s5, [#allocation4]
    $region33: #{roi_2mlp_head_forward.1} parent=1 // pred_fallthru
      _
    // Predicated region
    $region34: #{roi_2mlp_head_forward.1} parent=1 // pred_check
      _
    $region35: #{roi_2mlp_head_forward.1} parent=1 // pred_check_branch
      %245 = sbr.rel (0) target = $region37
    $region36: #{roi_2mlp_head_forward.1} parent=1 // pred_region
      %246 = dma.done [#allocation4], 128
    $region37: #{roi_2mlp_head_forward.1} parent=1 // pred_fallthru
      _
    %247 = vsyncpa [#allocation4], 1

</llo_original>
